<compile_context>
chip_gen: v7x
topology: tpu7x:2x2x1
jax: 0.10.0
libtpu: 0.0.40
codegen_flags: <defaults>
</compile_context>

<pallas_src>
import functools

import jax
import jax.numpy as jnp
from jax.experimental import pallas as pl
from jax.experimental.pallas import tpu as pltpu


# --------------------------------------------------------------------------
# roll-convention probe (conv kernel is agnostic to pltpu.roll's sign)
# --------------------------------------------------------------------------

def _roll_probe_kernel(x_ref, o_ref):
    o_ref[...] = pltpu.roll(x_ref[...], shift=1, axis=1)


def roll_shift_is_forward():
    """True iff pltpu.roll(x, +1, axis) moves element i to i+1 (np.roll)."""
    x = jnp.broadcast_to(jax.lax.iota(jnp.float32, 128)[None, :], (8, 128))
    y = pl.pallas_call(
        _roll_probe_kernel,
        out_shape=jax.ShapeDtypeStruct((8, 128), jnp.float32),
    )(x)
    return bool(y[0, 1] == 0.0)


# --------------------------------------------------------------------------
# Conv 3x3 (padding=1) + bias + ReLU, channel-major, lane-dense output
# --------------------------------------------------------------------------

def _conv3x3_kernel(s_ref, w_ref, b_ref, o_ref, *, width, roll_forward):
    """One lane-dense block of relu(conv3x3(x) + b).

    s_ref : [3*Cin, TM] bf16   row kh*Cin+ci = input row (h+kh) of H-padded x
    w_ref : [3, Cout, 3*Cin]   w_ref[kw][co, kh*Cin+ci] = torch_w[co,ci,kh,kw]
    b_ref : [Cout, 1]  f32
    o_ref : [Cout, TM] f32     pixel index m = (b*H + h)*W + w on lanes
    """
    s = s_ref[...]
    tm = s.shape[1]
    col = jax.lax.broadcasted_iota(jnp.int32, (1, tm), 1) % width
    zero = jnp.zeros((), s.dtype)

    r_a = pltpu.roll(s, shift=1, axis=1)        # s[m-1] under np.roll sign
    r_b = pltpu.roll(s, shift=tm - 1, axis=1)   # s[m+1] under np.roll sign
    s_left, s_right = (r_a, r_b) if roll_forward else (r_b, r_a)
    # Zero the taps that fall outside the image (PyTorch zero padding); these
    # masked lanes also absorb the circular wrap of the in-block roll.
    s_left = jnp.where(col == 0, zero, s_left)             # column w-1
    s_right = jnp.where(col == width - 1, zero, s_right)   # column w+1

    acc = jnp.dot(w_ref[0], s_left, preferred_element_type=jnp.float32)
    acc = acc + jnp.dot(w_ref[1], s, preferred_element_type=jnp.float32)
    acc = acc + jnp.dot(w_ref[2], s_right, preferred_element_type=jnp.float32)
    o_ref[...] = jnp.maximum(acc + b_ref[...], 0.0)


def conv3x3_relu_cm(x_cm, wk, bias_col, *, block_m, roll_forward):
    """x_cm: [Cin, B, H, W] f32 -> [Cout, B*H*W] f32 (channel-major)."""
    cin, bsz, hgt, wid = x_cm.shape
    cout = wk.shape[1]
    m_total = bsz * hgt * wid
    assert block_m % wid == 0 and m_total % block_m == 0

    # Only materialized conv glue: 3-row H-shifted stack, lane dense, bf16.
    xp = jnp.pad(x_cm, ((0, 0), (0, 0), (1, 1), (0, 0)))
    stack = jnp.concatenate(
        [xp[:, :, kh:kh + hgt, :].reshape(cin, m_total) for kh in range(3)],
        axis=0).astype(jnp.bfloat16)                       # [3*Cin, M]

    kernel = functools.partial(_conv3x3_kernel, width=wid,
                               roll_forward=roll_forward)
    return pl.pallas_call(
        kernel,
        out_shape=jax.ShapeDtypeStruct((cout, m_total), jnp.float32),
        grid=(m_total // block_m,),
        in_specs=[
            pl.BlockSpec((3 * cin, block_m), lambda i: (0, i)),
            pl.BlockSpec((3, cout, 3 * cin), lambda i: (0, 0, 0)),
            pl.BlockSpec((cout, 1), lambda i: (0, 0)),
        ],
        out_specs=pl.BlockSpec((cout, block_m), lambda i: (0, i)),
        compiler_params=pltpu.CompilerParams(
            dimension_semantics=("parallel",)),
    )(stack, wk, bias_col)


# --------------------------------------------------------------------------
# MaxPool 2x2 stride 2, channel-major, lane-dense blocks
# --------------------------------------------------------------------------

def _maxpool_kernel(x_ref, se_ref, so_ref, o_ref):
    """x_ref: [C, TR, 2, W] (row pairs), se/so: [W, W/2] even/odd column
    selectors, o_ref: [C, TR, W/2]."""
    c, tr, _, w = x_ref.shape
    x = x_ref[...].reshape(c * tr, 2, w)
    hmax = jnp.maximum(x[:, 0, :], x[:, 1, :])             # row-pair max
    y_even = jnp.dot(hmax, se_ref[...], preferred_element_type=jnp.float32)
    y_odd = jnp.dot(hmax, so_ref[...], preferred_element_type=jnp.float32)
    o_ref[...] = jnp.maximum(y_even, y_odd).reshape(c, tr, w // 2)


def maxpool2x2_cm(y_flat, *, n_rows, width, block_rows):
    """y_flat: [C, n_rows*width] (row index = b*H + h) -> [C, n_rows/2, width/2]."""
    c = y_flat.shape[0]
    half_rows, wo = n_rows // 2, width // 2
    assert half_rows % block_rows == 0
    x_view = y_flat.reshape(c, half_rows, 2, width)         # free reshape
    eye = jnp.eye(width, dtype=jnp.float32)
    sel_even, sel_odd = eye[:, 0::2], eye[:, 1::2]
    return pl.pallas_call(
        _maxpool_kernel,
        out_shape=jax.ShapeDtypeStruct((c, half_rows, wo), jnp.float32),
        grid=(half_rows // block_rows,),
        in_specs=[
            pl.BlockSpec((c, block_rows, 2, width), lambda i: (0, i, 0, 0)),
            pl.BlockSpec((width, wo), lambda i: (0, 0)),
            pl.BlockSpec((width, wo), lambda i: (0, 0)),
        ],
        out_specs=pl.BlockSpec((c, block_rows, wo), lambda i: (0, i, 0)),
        compiler_params=pltpu.CompilerParams(
            dimension_semantics=("parallel",)),
    )(x_view, sel_even, sel_odd)


# --------------------------------------------------------------------------
# FC head: fc1 (bf16 weight stream, f32 acc) with fused bias+ReLU+fc2
# --------------------------------------------------------------------------

def _fc_fused_kernel(a_ref, w1_ref, b1_ref, w2_ref, o_ref, acc_ref):
    """Grid = (output-half [parallel], K-tile [arbitrary])."""
    k = pl.program_id(1)

    @pl.when(k == 0)
    def _():
        acc_ref[...] = jnp.zeros_like(acc_ref)

    acc_ref[...] += jnp.dot(a_ref[...], w1_ref[0],
                            preferred_element_type=jnp.float32)

    @pl.when(k == pl.num_programs(1) - 1)
    def _():
        hidden = jnp.maximum(acc_ref[...] + b1_ref[0], 0.0)      # [B, 64]
        o_ref[0] = jnp.dot(hidden, w2_ref[0],
                           preferred_element_type=jnp.float32)   # [B, 3]


def fc_head(flat_bf16, w1_split, b1_split, w2_split, b2, *, block_k):
    bsz, k_total = flat_bf16.shape
    n_half, _, half = w1_split.shape
    n_out = w2_split.shape[-1]
    assert k_total % block_k == 0
    partials = pl.pallas_call(
        _fc_fused_kernel,
        out_shape=jax.ShapeDtypeStruct((n_half, bsz, n_out), jnp.float32),
        grid=(n_half, k_total // block_k),
        in_specs=[
            pl.BlockSpec((bsz, block_k), lambda n, k: (0, k)),
            pl.BlockSpec((1, block_k, half), lambda n, k: (n, k, 0)),
            pl.BlockSpec((1, 1, half), lambda n, k: (n, 0, 0)),
            pl.BlockSpec((1, half, n_out), lambda n, k: (n, 0, 0)),
        ],
        out_specs=pl.BlockSpec((1, bsz, n_out), lambda n, k: (n, 0, 0)),
        scratch_shapes=[pltpu.VMEM((bsz, half), jnp.float32)],
        compiler_params=pltpu.CompilerParams(
            dimension_semantics=("parallel", "arbitrary")),
    )(flat_bf16, w1_split, b1_split, w2_split)
    return jnp.sum(partials, axis=0) + b2[None, :]


# --------------------------------------------------------------------------
# Full model forward
# --------------------------------------------------------------------------

def cnn_forward(x_nchw, p, *, roll_forward):
    """CNNModel.forward: x [B, 3, 128, 128] f32 -> [B, 3] f32."""
    bsz = x_nchw.shape[0]
    x_cm = jnp.transpose(x_nchw, (1, 0, 2, 3)).astype(jnp.float32)

    y = conv3x3_relu_cm(x_cm, p["wk1"], p["bc1"], block_m=8192,
                        roll_forward=roll_forward)           # [16, B*128*128]
    y = maxpool2x2_cm(y, n_rows=bsz * 128, width=128,
                      block_rows=64)                         # [16, B*64, 64]

    y = conv3x3_relu_cm(y.reshape(16, bsz, 64, 64), p["wk2"], p["bc2"],
                        block_m=4096, roll_forward=roll_forward)  # [32, B*64*64]
    y = maxpool2x2_cm(y, n_rows=bsz * 64, width=64,
                      block_rows=32)                         # [32, B*32, 32]

    # PyTorch x.view(B, -1) on NCHW -> (c, h, w)-ordered features (tiny permute).
    flat = (y.reshape(32, bsz, 32, 32).transpose(1, 0, 2, 3)
             .reshape(bsz, 32 * 32 * 32).astype(jnp.bfloat16))
    return fc_head(flat, p["fc1_wT_split"], p["fc1_b_split"],
                   p["fc2_wT_split"], p["fc2_b"], block_k=8192)


# --------------------------------------------------------------------------
# Parameters
# --------------------------------------------------------------------------

def init_params(key):
    """PyTorch-style U(-1/sqrt(fan_in), 1/sqrt(fan_in)) init (raw layout)."""
    ks = jax.random.split(key, 8)

    def u(k, shape, fan_in):
        bound = 1.0 / (fan_in ** 0.5)
        return jax.random.uniform(k, shape, jnp.float32, -bound, bound)

    return {
        "conv1_w": u(ks[0], (16, 3, 3, 3), 3 * 9),
        "conv1_b": u(ks[1], (16,), 3 * 9),
        "conv2_w": u(ks[2], (32, 16, 3, 3), 16 * 9),
        "conv2_b": u(ks[3], (32,), 16 * 9),
        "fc1_w": u(ks[4], (128, 32 * 32 * 32), 32 * 32 * 32),
        "fc1_b": u(ks[5], (128,), 32 * 32 * 32),
        "fc2_w": u(ks[6], (3, 128), 128),
        "fc2_b": u(ks[7], (3,), 128),
    }


def prepare_params(p, *, n_half=2):
    """One-time repack OUTSIDE jit: conv weights to kw-major [3,Cout,3*Cin]
    bf16; fc1 weight pre-transposed/cast to bf16 and split into two 64-wide
    output halves so the forward never transposes the 16 MB matrix in-graph."""
    def conv_pack(w):
        cout, cin = w.shape[0], w.shape[1]
        return (jnp.transpose(w, (3, 0, 2, 1))
                .reshape(3, cout, 3 * cin).astype(jnp.bfloat16))

    k_in, n_hidden = p["fc1_w"].shape[1], p["fc1_w"].shape[0]
    half = n_hidden // n_half
    fc1_wt = p["fc1_w"].T                                    # [K, 128]
    return {
        "wk1": conv_pack(p["conv1_w"]),
        "bc1": p["conv1_b"].reshape(-1, 1).astype(jnp.float32),
        "wk2": conv_pack(p["conv2_w"]),
        "bc2": p["conv2_b"].reshape(-1, 1).astype(jnp.float32),
        "fc1_wT_split": (fc1_wt.reshape(k_in, n_half, half)
                         .transpose(1, 0, 2).astype(jnp.bfloat16)),
        "fc1_b_split": p["fc1_b"].reshape(n_half, 1, half).astype(jnp.float32),
        "fc2_wT_split": p["fc2_w"].T.reshape(n_half, half, -1).astype(jnp.float32),
        "fc2_b": p["fc2_b"].astype(jnp.float32),
    }


# --------------------------------------------------------------------------
# Pure-JAX float32 reference (PyTorch semantics) for validation
# --------------------------------------------------------------------------

def cnn_reference(x, p):
    dn = ("NCHW", "OIHW", "NCHW")
    y = jax.lax.conv_general_dilated(x, p["conv1_w"], (1, 1), "SAME",
                                     dimension_numbers=dn)
    y = jnp.maximum(y + p["conv1_b"].reshape(1, -1, 1, 1), 0.0)
    y = jax.lax.reduce_window(y, -jnp.inf, jax.lax.max,
                              (1, 1, 2, 2), (1, 1, 2, 2), "VALID")
    y = jax.lax.conv_general_dilated(y, p["conv2_w"], (1, 1), "SAME",
                                     dimension_numbers=dn)
    y = jnp.maximum(y + p["conv2_b"].reshape(1, -1, 1, 1), 0.0)
    y = jax.lax.reduce_window(y, -jnp.inf, jax.lax.max,
                              (1, 1, 2, 2), (1, 1, 2, 2), "VALID")
    flat = y.reshape(y.shape[0], -1)
    h = jnp.maximum(flat @ p["fc1_w"].T + p["fc1_b"], 0.0)
    return h @ p["fc2_w"].T + p["fc2_b"]


if __name__ == "__main__":
    key = jax.random.PRNGKey(0)
    k_x, k_p = jax.random.split(key)

    # fc1 expects 32*32*32 features -> 128x128 spatial input; batch = 2.
    x = jax.random.normal(k_x, (2, 3, 128, 128), dtype=jnp.float32)
    raw_params = init_params(k_p)
    params = prepare_params(raw_params)          # weight repack outside jit

    roll_fwd = roll_shift_is_forward()           # tiny one-time probe kernel
    fwd = jax.jit(functools.partial(cnn_forward, roll_forward=roll_fwd))

    out = fwd(x, params)
    jax.block_until_ready(out)
    assert out.shape == (2, 3) and out.dtype == jnp.float32

    ref = jax.jit(cnn_reference)(x, raw_params)
    jax.block_until_ready(ref)
    max_err = float(jnp.max(jnp.abs(out - ref)))
    if not bool(jnp.allclose(out, ref, rtol=5e-2, atol=1e-2)):
        raise AssertionError(
            f"Pallas forward mismatch vs reference, max|diff|={max_err:.3e}")

    print("KERNEL_OK")
</pallas_src>

<mosaic_0001>
module attributes {stable_mosaic.version = 11 : i64} {
  func.func @_roll_probe_kernel(%arg0: memref<8x128xf32, #tpu.memory_space<vmem>>, %arg1: memref<8x128xf32, #tpu.memory_space<vmem>>) attributes {dimension_semantics = [], scalar_prefetch = 0 : i64, scratch_operands = 0 : i64, tpu.core_type = #tpu.core_type<tc>} {
    %c0 = arith.constant 0 : index
    %c0_0 = arith.constant 0 : index
    %0 = vector.load %arg0[%c0, %c0_0] : memref<8x128xf32, #tpu.memory_space<vmem>>, vector<8x128xf32>
    %c1_i32 = arith.constant 1 : i32
    %1 = tpu.dynamic_rotate %0 by %c1_i32 dim 1 : vector<8x128xf32>, i32 -> vector<8x128xf32>
    %c0_1 = arith.constant 0 : index
    %c0_2 = arith.constant 0 : index
    %2 = vector.load %arg1[%c0_1, %c0_2] : memref<8x128xf32, #tpu.memory_space<vmem>>, vector<8x128xf32>
    tpu.vector_store %arg1[%c0_1, %c0_2], %1 {strides = array<i32>} : memref<8x128xf32, #tpu.memory_space<vmem>>, vector<8x128xf32>,
    return
  }
}

</mosaic_0001>

<llo_original>
// kernel: tpu_custom_call.1
$region0: #{tpu_custom_call.1}
  #allocation0 [shape = 'u32[]', space=smem, size = 0x4, offset = 0x4, fixed_abs, tag = 'smem constant byte address 0x4 - core index']
  #allocation1 [shape = 'u32[144,128]{1,0:T(1,128)}', space=vmem, size = 0x12000, scoped, tag = 'internal scratch']
  %s0 = inlined_call_operand.hbm [shape: f32[8,128], index: 0, kind: input, shape index: {}]
  %s1 = inlined_call_operand.hbm [shape: f32[8,128], index: 1, kind: output, shape index: {}]
  %s2 = sld [smem:[#allocation0]]
  $region18: #{tpu_custom_call.1} parent=0
    _
  %s4 = ssub.s32 1, %s2
  %s5 = scalar_select 0, %s4, %s2
  $region1: #{tpu_custom_call.1} parent=0
    #allocation2 [shape = 'u8[4096]{0}', space=vmem, size = 0x1000, scoped, tag = 'input window, operand 0, single buffered']
    #allocation3 [shape = 's32[1]{0}', space=sflag, size = 0x4, scoped, tag = 'scoped memory for tpu_custom_call.1']
    #allocation4 [shape = 's32[1]{0}', space=sflag, size = 0x4, scoped, tag = 'scoped memory for tpu_custom_call.1']
    #allocation5 [shape = 'u8[4096]{0}', space=vmem, size = 0x1000, scoped, tag = 'output window, operand 0, single buffered']
    %6 = vsyncpa [#allocation3], 0
    %7 = vsyncpa [#allocation4], 0
    // Predicated region
    $region2: #{tpu_custom_call.1} parent=1 // pred_check
      _
    $region3: #{tpu_custom_call.1} parent=1 // pred_check_branch
      %9 = sbr.rel (0) target = $region5
    $region4: #{tpu_custom_call.1} parent=1 // pred_region
      %s11 = ssub.s32 128, 128
      %12 = vsyncadd [#allocation3], %s11
      %s14 = sshll.u32 [#allocation2], 4
      %s15 = int_to_ptr.vmem [resolvable:$true] %s14
      %17 = dma.hbm_to_vmem [thread:$0]  %s0, 128, %s15, [#allocation3]
    $region5: #{tpu_custom_call.1} parent=1 // pred_fallthru
      _
    // Predicated region
    $region6: #{tpu_custom_call.1} parent=1 // pred_check
      _
    $region7: #{tpu_custom_call.1} parent=1 // pred_check_branch
      %19 = sbr.rel (0) target = $region9
    $region8: #{tpu_custom_call.1} parent=1 // pred_region
      %20 = dma.done [#allocation3], 128
    $region9: #{tpu_custom_call.1} parent=1 // pred_fallthru
      _
    %v21 = vld [vmem:[#allocation2] sm:$0xff]
    %22 = vrot.lane.b32.xlu0 %v21, 1
    %v23 = vpop.permute.xlu0 %22
    %24 = vst [vmem:[#allocation5] sm:$0xff] %v23
    // Predicated region
    $region10: #{tpu_custom_call.1} parent=1 // pred_check
      _
    $region11: #{tpu_custom_call.1} parent=1 // pred_check_branch
      %26 = sbr.rel (0) target = $region13
    $region12: #{tpu_custom_call.1} parent=1 // pred_region
      %s28 = ssub.s32 128, 128
      %29 = vsyncadd [#allocation4], %s28
      %s31 = sshll.u32 [#allocation5], 4
      %s32 = int_to_ptr.vmem [resolvable:$true] %s31
      %34 = dma.vmem_to_hbm [thread:$0]  %s32, 128, %s1, [#allocation4]
    $region13: #{tpu_custom_call.1} parent=1 // pred_fallthru
      _
    // Predicated region
    $region14: #{tpu_custom_call.1} parent=1 // pred_check
      _
    $region15: #{tpu_custom_call.1} parent=1 // pred_check_branch
      %36 = sbr.rel (0) target = $region17
    $region16: #{tpu_custom_call.1} parent=1 // pred_region
      %37 = dma.done [#allocation4], 128
    $region17: #{tpu_custom_call.1} parent=1 // pred_fallthru
      _
    %38 = vsyncpa [#allocation3], 1
    %39 = vsyncpa [#allocation4], 1

</llo_original>
